<compile_context>
chip_gen: v7x
topology: tpu7x:2x2x1
jax: 0.10.0
libtpu: 0.0.40
codegen_flags: <defaults>
</compile_context>

<pallas_src>
import functools

import jax
import jax.numpy as jnp
from jax.experimental import pallas as pl
from jax.experimental.pallas import tpu as pltpu


def _pow_w(w, beta):
    """w ** beta with trace-time constant folding (beta is a Python number).

    Note: non-integer beta lowers to exp(beta*log(w)); with w == 0 after the
    clamp this produces a transient -inf (result is still 0, matching PyTorch).
    """
    b = float(beta)
    if b == 1.0:
        return w
    if b == float(int(b)) and 1 < int(b) <= 4:
        out = w
        for _ in range(int(b) - 1):
            out = out * w
        return out
    return w ** b


def _wsl_loss_kernel(student_ref, teacher_ref, label_ref, loss_ref, *,
                     beta, with_soft_target, temperature,
                     only_teacher_temperature, remove_not_noisy_reg):
    s = student_ref[...].astype(jnp.float32)     # (Nt, C)
    t = teacher_ref[...].astype(jnp.float32)     # (Nt, C)
    lab = label_ref[...]                         # (Nt, 1) int32
    Nt, C = s.shape
    T = float(temperature)
    inv_T = 1.0 / T

    # One reusable boolean mask for all label gathers (no f32 one-hot tile).
    col = jax.lax.broadcasted_iota(jnp.int32, (Nt, C), 1)
    is_lab = col == lab                          # (Nt, C) predicate

    def gather_label(x):
        # x[row, label[row]] as an (Nt, 1) row-reduction via select + sum.
        return jnp.sum(jnp.where(is_lab, x, 0.0), axis=1, keepdims=True)

    # ---- student log-sum-exp (with temperature unless only_teacher_temperature)
    use_T_on_student = (not only_teacher_temperature) and T != 1.0
    s_scaled = s * inv_T if use_T_on_student else s
    m = jnp.max(s_scaled, axis=1, keepdims=True)
    sum_exp = jnp.sum(jnp.exp(s_scaled - m), axis=1, keepdims=True)
    base = m + jnp.log(sum_exp)                  # (Nt, 1) logsumexp(s_scaled)
    s_lbl = gather_label(s_scaled)
    softmax_loss_s = base - s_lbl                # NLL of student at the label

    # ---- teacher NLL at the label + distill row-sum (logsm_s never formed) ----
    if with_soft_target:
        # teacher already holds probabilities (not assumed exactly normalized)
        t_lbl = gather_label(t)
        softmax_loss_t = -jnp.log(t_lbl)         # matches reference (no eps guard)
        sum_t = jnp.sum(t, axis=1, keepdims=True)
        tdot = jnp.sum(t * s_scaled, axis=1, keepdims=True)
        # sum(-teacher * logsm_s) == base*sum(teacher) - sum(teacher*s_scaled)
        distill = base * sum_t - tdot
    else:
        tt = t if T == 1.0 else t * inv_T
        tm = jnp.max(tt, axis=1, keepdims=True)
        zt = tt - tm
        et = jnp.exp(zt)
        sum_et = jnp.sum(et, axis=1, keepdims=True)
        zt_lbl = gather_label(zt)
        softmax_loss_t = jnp.log(sum_et) - zt_lbl
        # softmax(tt) is never materialized; fold 1/sum_et per row.
        tdot = jnp.sum(et * s_scaled, axis=1, keepdims=True)
        distill = base - tdot / sum_et

    if remove_not_noisy_reg:
        # argmax(teacher) is softmax-invariant -> take it on raw (scaled) logits.
        if with_soft_target:
            t_src = t
            t_max = jnp.max(t, axis=1, keepdims=True)
        else:
            t_src = tt
            t_max = tm
        argmax_idx = jnp.min(jnp.where(t_src == t_max, col, C),
                             axis=1, keepdims=True)
        t_wrong = argmax_idx != lab
        mask = (softmax_loss_s < softmax_loss_t) & jnp.logical_not(t_wrong)
        # mask/~mask partition all rows, so the clamp + 1-exp(-w) of the main
        # path would be fully overwritten -> skipped entirely here.
        w = jnp.where(mask, 0.0, 1.0)

        # ce_loss analytically: soft_target/logsm_plain are never materialized.
        # ce = 0.99*NLL_plain + (0.01/1000)*sum(-logsm_plain)
        #    = 0.99*(lse_plain - s[label]) + (0.01/1000)*(C*lse_plain - sum(s))
        # NOTE: PyTorch reference hard-codes 0.01/1000 (written for 1000 classes);
        # kept verbatim to preserve the original forward semantics.
        if not use_T_on_student:
            base2 = base                         # plain == temperature softmax
            s_lbl_plain = s_lbl
            sum_s = jnp.sum(s_scaled, axis=1, keepdims=True)   # == sum(s)
        else:
            m2 = jnp.max(s, axis=1, keepdims=True)
            lse2 = jnp.log(jnp.sum(jnp.exp(s - m2), axis=1, keepdims=True))
            base2 = m2 + lse2
            s_lbl_plain = gather_label(s)
            sum_s = jnp.sum(s, axis=1, keepdims=True)
        nll_plain = base2 - s_lbl_plain
        ce_loss = 0.99 * nll_plain + (0.01 / 1000.0) * (C * base2 - sum_s)

        d = distill * _pow_w(w, beta)
        if use_T_on_student:
            d = d * (T * T)
        batch_loss = ce_loss * (1.0 - w) + d * w
    else:
        # Per-row divide only ((Nt,1)); matches PyTorch incl. the /0 behaviour
        # when teacher prob at the label is exactly 1.
        w = softmax_loss_s / softmax_loss_t
        w = jnp.where(w < 0.0, 0.0, w)
        w = 1.0 - jnp.exp(-w)
        batch_loss = distill * _pow_w(w, beta)
        if use_T_on_student:
            batch_loss = batch_loss * (T * T)

    loss_ref[...] = batch_loss                   # (Nt, 1) f32


def _tpu_vmem_capacity_bytes():
    try:
        return int(pltpu.get_tpu_info().vmem_capacity_bytes)
    except Exception:
        return None


def _packing_sublane(itemsize):
    # 8 rows for f32, 16 for bf16/f16, 32 for int8/fp8.
    return max(8, 8 * (4 // max(int(itemsize), 1)))


def _choose_n_tile(n_rows, n_cols, itemsize, sublane, budget, *,
                   with_soft_target, remove_not_noisy_reg, use_T_on_student):
    """Largest row tile keeping double-buffered inputs + f32 temporaries in budget."""
    n_f32 = 5                                    # s, t, s_scaled, z, exp(z)
    if not with_soft_target:
        n_f32 += 3                               # tt, zt, exp(zt)
    if remove_not_noisy_reg and use_T_on_student:
        n_f32 += 2                               # plain-softmax pass temporaries
    # 2 inputs x 2 pipeline buffers (native dtype) + int32 col/mask + f32 temps
    bytes_per_row = n_cols * (4 * itemsize + 4 + 4 * n_f32) + 32
    n_tile = budget // max(bytes_per_row, 1)
    n_tile = max(sublane, (int(n_tile) // sublane) * sublane)
    n_tile = min(n_tile, 2048)
    n_tile = min(n_tile, pl.cdiv(n_rows, sublane) * sublane)
    return int(n_tile)


def wsl_loss(student, teacher, label, *, beta=1, with_soft_target=True,
             temperature=1, only_teacher_temperature=False,
             remove_not_noisy_reg=False, n_tile=None):
    """Pallas implementation of WSLLoss.forward. Returns a scalar float32."""
    N, C = student.shape
    assert teacher.shape == (N, C)
    label2d = label.astype(jnp.int32).reshape(N, 1)

    itemsize = min(jnp.dtype(student.dtype).itemsize,
                   jnp.dtype(teacher.dtype).itemsize)
    sublane = _packing_sublane(itemsize)
    use_T_on_student = (not only_teacher_temperature) and float(temperature) != 1.0

    # Generation-aware VMEM sizing: v7x has 64 MiB/TC, v5e/v6e have 128 MiB.
    vmem_cap = _tpu_vmem_capacity_bytes()
    if vmem_cap is None:
        budget, vmem_limit = 16 * 1024 * 1024, 32 * 1024 * 1024   # safe everywhere
    elif vmem_cap <= 64 * 1024 * 1024:
        budget, vmem_limit = 12 * 1024 * 1024, 48 * 1024 * 1024   # v7x
    else:
        budget, vmem_limit = 24 * 1024 * 1024, 64 * 1024 * 1024   # v5e / v6e

    if n_tile is None:
        n_tile = _choose_n_tile(
            N, C, itemsize, sublane, budget,
            with_soft_target=with_soft_target,
            remove_not_noisy_reg=remove_not_noisy_reg,
            use_T_on_student=use_T_on_student)
    else:
        n_tile = max(sublane, (int(n_tile) + sublane - 1) // sublane * sublane)
        n_tile = min(n_tile, pl.cdiv(N, sublane) * sublane)

    kernel = functools.partial(
        _wsl_loss_kernel,
        beta=beta,
        with_soft_target=with_soft_target,
        temperature=temperature,
        only_teacher_temperature=only_teacher_temperature,
        remove_not_noisy_reg=remove_not_noisy_reg,
    )

    per_row = pl.pallas_call(
        kernel,
        out_shape=jax.ShapeDtypeStruct((N, 1), jnp.float32),
        grid_spec=pltpu.PrefetchScalarGridSpec(
            num_scalar_prefetch=0,
            grid=(pl.cdiv(N, n_tile),),
            in_specs=[
                pl.BlockSpec((n_tile, C), lambda i: (i, 0)),   # student (native dtype)
                pl.BlockSpec((n_tile, C), lambda i: (i, 0)),   # teacher (native dtype)
                pl.BlockSpec((n_tile, 1), lambda i: (i, 0)),   # label
            ],
            out_specs=pl.BlockSpec((n_tile, 1), lambda i: (i, 0)),
        ),
        compiler_params=pltpu.CompilerParams(
            dimension_semantics=("parallel",),
            vmem_limit_bytes=vmem_limit,
        ),
    )(student, teacher, label2d)      # NO host-side up-cast: native dtype over HBM

    return jnp.mean(per_row[:, 0])


# ----------------------------- pure-JAX reference ------------------------------

def _wsl_loss_ref(student, teacher, label, *, beta=1, with_soft_target=True,
                  temperature=1, only_teacher_temperature=False,
                  remove_not_noisy_reg=False):
    student = student.astype(jnp.float32)
    teacher = teacher.astype(jnp.float32)
    T = float(temperature)
    if not with_soft_target:
        teacher = jax.nn.softmax(teacher / T, axis=1)
    if only_teacher_temperature:
        logsm_t = jax.nn.log_softmax(student, axis=1)
    else:
        logsm_t = jax.nn.log_softmax(student / T, axis=1)
    loss_s = -jnp.take_along_axis(logsm_t, label[:, None], axis=1)[:, 0]
    loss_t = -jnp.take_along_axis(jnp.log(teacher), label[:, None], axis=1)[:, 0]
    w = loss_s / loss_t
    w = jnp.where(w < 0, 0.0, w)
    w = 1.0 - jnp.exp(-w)
    if remove_not_noisy_reg:
        t_wrong = jnp.argmax(teacher, axis=1) != label
        mask = (loss_s < loss_t) & (~t_wrong)
        w = jnp.where(mask, 0.0, 1.0)
        onehot = jax.nn.one_hot(label, student.shape[1], dtype=jnp.float32)
        soft_target = onehot * 0.99 + 0.01 / 1000.0
        logsm = jax.nn.log_softmax(student, axis=1)
        ce = jnp.sum(-soft_target * logsm, axis=1)
        distill = jnp.sum(-teacher * logsm_t, axis=1) * (w ** beta)
        if not only_teacher_temperature:
            distill = distill * (T * T)
        batch = ce * (1.0 - w) + distill * w
    else:
        batch = jnp.sum(-teacher * logsm_t, axis=1) * (w ** beta)
        if not only_teacher_temperature:
            batch = batch * (T * T)
    return jnp.mean(batch)


if __name__ == "__main__":
    key = jax.random.PRNGKey(0)
    k1, k2, k3 = jax.random.split(key, 3)

    N, C = 16, 128
    student_f32 = jax.random.normal(k1, (N, C), dtype=jnp.float32)
    teacher_logits = jax.random.normal(k2, (N, C), dtype=jnp.float32)
    teacher_probs = jax.nn.softmax(teacher_logits, axis=1)
    label = jax.random.randint(k3, (N,), 0, C, dtype=jnp.int32)

    configs = [
        dict(beta=1, with_soft_target=True, temperature=1,
             only_teacher_temperature=False, remove_not_noisy_reg=False),
        dict(beta=2, with_soft_target=False, temperature=4,
             only_teacher_temperature=False, remove_not_noisy_reg=False),
        dict(beta=1, with_soft_target=True, temperature=2,
             only_teacher_temperature=False, remove_not_noisy_reg=True),
        dict(beta=2, with_soft_target=False, temperature=2,
             only_teacher_temperature=False, remove_not_noisy_reg=True),
        dict(beta=1, with_soft_target=False, temperature=3,
             only_teacher_temperature=True, remove_not_noisy_reg=False),
        dict(beta=1, with_soft_target=True, temperature=3,
             only_teacher_temperature=True, remove_not_noisy_reg=True),
    ]

    # f32 inputs, small tile so the 1-D grid has multiple (pipelined) steps.
    for cfg in configs:
        teacher_in = teacher_probs if cfg["with_soft_target"] else teacher_logits
        out = jax.block_until_ready(
            wsl_loss(student_f32, teacher_in, label, n_tile=8, **cfg))
        ref = _wsl_loss_ref(student_f32, teacher_in, label, **cfg)
        assert jnp.allclose(out, ref, rtol=3e-5, atol=3e-5), (cfg, out, ref)

    # bf16 inputs: no host-side up-cast, kernel casts to f32 internally;
    # auto tile sizing rounds rows to the bf16 packing sublane (16).
    student_bf16 = student_f32.astype(jnp.bfloat16)
    teacher_bf16 = teacher_probs.astype(jnp.bfloat16)
    out = jax.block_until_ready(wsl_loss(student_bf16, teacher_bf16, label))
    ref = _wsl_loss_ref(student_bf16, teacher_bf16, label)
    assert jnp.allclose(out, ref, rtol=1e-4, atol=1e-4), (out, ref)

    print("KERNEL_OK")
</pallas_src>

<mosaic_0001>
module attributes {stable_mosaic.version = 11 : i64} {
  func.func @_wsl_loss_kernel(%arg0: i32, %arg1: memref<8x128xf32, #tpu.memory_space<vmem>>, %arg2: memref<8x128xf32, #tpu.memory_space<vmem>>, %arg3: memref<8x1xi32, #tpu.memory_space<vmem>>, %arg4: memref<8x1xf32, #tpu.memory_space<vmem>>) attributes {dimension_semantics = [#tpu.dimension_semantics<parallel>], iteration_bounds = array<i64: 2>, scalar_prefetch = 0 : i64, scratch_operands = 0 : i64, tpu.core_type = #tpu.core_type<tc>, window_params = [{transform_indices = @transform_0, window_bounds = array<i64: 8, 128>}, {transform_indices = @transform_1, window_bounds = array<i64: 8, 128>}, {transform_indices = @transform_2, window_bounds = array<i64: 8, 1>}, {transform_indices = @transform_3, window_bounds = array<i64: 8, 1>}]} {
    %c0 = arith.constant 0 : index
    %c0_0 = arith.constant 0 : index
    %0 = vector.load %arg1[%c0, %c0_0] : memref<8x128xf32, #tpu.memory_space<vmem>>, vector<8x128xf32>
    %c0_1 = arith.constant 0 : index
    %c0_2 = arith.constant 0 : index
    %1 = vector.load %arg2[%c0_1, %c0_2] : memref<8x128xf32, #tpu.memory_space<vmem>>, vector<8x128xf32>
    %c0_3 = arith.constant 0 : index
    %c0_4 = arith.constant 0 : index
    %2 = vector.load %arg3[%c0_3, %c0_4] : memref<8x1xi32, #tpu.memory_space<vmem>>, vector<8x1xi32>
    %3 = tpu.iota {dimensions = array<i32: 1>} : vector<8x128xi32>
    %4 = vector.broadcast %2 : vector<8x1xi32> to vector<8x128xi32>
    %5 = arith.cmpi eq, %3, %4 : vector<8x128xi32>
    %cst = arith.constant dense<0xFF800000> : vector<8xf32>
    %6 = vector.multi_reduction <maximumf>, %0, %cst [1] : vector<8x128xf32> to vector<8xf32>
    %7 = vector.shape_cast %6 : vector<8xf32> to vector<8x1xf32>
    %8 = vector.broadcast %7 : vector<8x1xf32> to vector<8x128xf32>
    %9 = arith.subf %0, %8 : vector<8x128xf32>
    %10 = math.exp %9 : vector<8x128xf32>
    %cst_5 = arith.constant dense<0.000000e+00> : vector<8xf32>
    %11 = vector.multi_reduction <add>, %10, %cst_5 [1] : vector<8x128xf32> to vector<8xf32>
    %12 = vector.shape_cast %11 : vector<8xf32> to vector<8x1xf32>
    %13 = math.log %12 : vector<8x1xf32>
    %14 = arith.addf %7, %13 : vector<8x1xf32>
    %cst_6 = arith.constant 0.000000e+00 : f32
    %15 = vector.broadcast %cst_6 : f32 to vector<8x128xf32>
    %16 = arith.select %5, %0, %15 : vector<8x128xi1>, vector<8x128xf32>
    %cst_7 = arith.constant dense<0.000000e+00> : vector<8xf32>
    %17 = vector.multi_reduction <add>, %16, %cst_7 [1] : vector<8x128xf32> to vector<8xf32>
    %18 = vector.shape_cast %17 : vector<8xf32> to vector<8x1xf32>
    %19 = arith.subf %14, %18 : vector<8x1xf32>
    %cst_8 = arith.constant 0.000000e+00 : f32
    %20 = vector.broadcast %cst_8 : f32 to vector<8x128xf32>
    %21 = arith.select %5, %1, %20 : vector<8x128xi1>, vector<8x128xf32>
    %cst_9 = arith.constant dense<0.000000e+00> : vector<8xf32>
    %22 = vector.multi_reduction <add>, %21, %cst_9 [1] : vector<8x128xf32> to vector<8xf32>
    %23 = vector.shape_cast %22 : vector<8xf32> to vector<8x1xf32>
    %24 = math.log %23 : vector<8x1xf32>
    %cst_10 = arith.constant 0.000000e+00 : f32
    %25 = vector.broadcast %cst_10 : f32 to vector<8x1xf32>
    %26 = arith.subf %25, %24 : vector<8x1xf32>
    %cst_11 = arith.constant dense<0.000000e+00> : vector<8xf32>
    %27 = vector.multi_reduction <add>, %1, %cst_11 [1] : vector<8x128xf32> to vector<8xf32>
    %28 = vector.shape_cast %27 : vector<8xf32> to vector<8x1xf32>
    %29 = arith.mulf %1, %0 : vector<8x128xf32>
    %cst_12 = arith.constant dense<0.000000e+00> : vector<8xf32>
    %30 = vector.multi_reduction <add>, %29, %cst_12 [1] : vector<8x128xf32> to vector<8xf32>
    %31 = vector.shape_cast %30 : vector<8xf32> to vector<8x1xf32>
    %32 = arith.mulf %14, %28 : vector<8x1xf32>
    %33 = arith.subf %32, %31 : vector<8x1xf32>
    %34 = arith.divf %19, %26 : vector<8x1xf32>
    %cst_13 = arith.constant 0.000000e+00 : f32
    %35 = vector.broadcast %cst_13 : f32 to vector<8x1xf32>
    %36 = arith.cmpf olt, %34, %35 : vector<8x1xf32>
    %cst_14 = arith.constant 0.000000e+00 : f32
    %37 = vector.broadcast %cst_14 : f32 to vector<8x1xf32>
    %38 = arith.select %36, %37, %34 : vector<8x1xi1>, vector<8x1xf32>
    %cst_15 = arith.constant 0.000000e+00 : f32
    %39 = vector.broadcast %cst_15 : f32 to vector<8x1xf32>
    %40 = arith.subf %39, %38 : vector<8x1xf32>
    %41 = math.exp %40 : vector<8x1xf32>
    %cst_16 = arith.constant 1.000000e+00 : f32
    %42 = vector.broadcast %cst_16 : f32 to vector<8x1xf32>
    %43 = arith.subf %42, %41 : vector<8x1xf32>
    %44 = arith.mulf %33, %43 : vector<8x1xf32>
    %c0_17 = arith.constant 0 : index
    %c0_18 = arith.constant 0 : index
    %45 = vector.load %arg4[%c0_17, %c0_18] : memref<8x1xf32, #tpu.memory_space<vmem>>, vector<8x1xf32>
    tpu.vector_store %arg4[%c0_17, %c0_18], %44 {strides = array<i32>} : memref<8x1xf32, #tpu.memory_space<vmem>>, vector<8x1xf32>,
    return
  }
  func.func @transform_0(%arg0: i32) -> (i32, i32) {
    %c0_i32 = arith.constant 0 : i32
    %c0_i32_0 = arith.constant 0 : i32
    return %arg0, %c0_i32 : i32, i32
  }
  func.func @transform_1(%arg0: i32) -> (i32, i32) {
    %c0_i32 = arith.constant 0 : i32
    %c0_i32_0 = arith.constant 0 : i32
    return %arg0, %c0_i32 : i32, i32
  }
  func.func @transform_2(%arg0: i32) -> (i32, i32) {
    %c0_i32 = arith.constant 0 : i32
    %c0_i32_0 = arith.constant 0 : i32
    return %arg0, %c0_i32 : i32, i32
  }
  func.func @transform_3(%arg0: i32) -> (i32, i32) {
    %c0_i32 = arith.constant 0 : i32
    %c0_i32_0 = arith.constant 0 : i32
    return %arg0, %c0_i32 : i32, i32
  }
}

</mosaic_0001>

<llo_original>
// kernel: tpu_custom_call.1
$region0: #{tpu_custom_call.1}
  #allocation0 [shape = 'u32[]', space=smem, size = 0x4, offset = 0x4, fixed_abs, tag = 'smem constant byte address 0x4 - core index']
  #allocation1 [shape = 'u32[144,128]{1,0:T(1,128)}', space=vmem, size = 0x12000, scoped, tag = 'internal scratch']
  %s0 = inlined_call_operand.vmem [shape: f32[16,128], index: 0, kind: input, shape index: {}]
  %s1 = inlined_call_operand.hbm [shape: f32[16,128], index: 1, kind: input, shape index: {}]
  %s2 = inlined_call_operand.vmem [shape: s32[16,1], index: 2, kind: input, shape index: {}]
  %s3 = inlined_call_operand.vmem [shape: f32[16,1], index: 3, kind: output, shape index: {}]
  %s4 = sld [smem:[#allocation0]]
  $region49: #{tpu_custom_call.1} parent=0
    _
  %s6 = ssub.s32 1, %s4
  %s7 = scalar_select 0, %s6, %s4
  $region1: #{tpu_custom_call.1} parent=0
    #allocation2 [shape = 'u8[8192]{0}', space=vmem, size = 0x2000, scoped, tag = 'input window, operand 1']
    #allocation3 [shape = 's32[2]{0}', space=sflag, size = 0x8, scoped, tag = 'scoped memory for tpu_custom_call.1']
    %8 = vsyncpa [#allocation3], 0
    %s9 = scalar_lea.sflag [#allocation3], 1
    %10 = vsyncpa %s9, 0
    loop: start=0, step=1, limit=4
    $region2: #{tpu_custom_call.1} parent=1 // loop_pre_header
      _
    $region3: #{tpu_custom_call.1} parent=1 // loop_header
      %s12 = sphi 0, %s16
      %p13 = scmp.ge.s32.totalorder %s12, 4
      %s22 = sphi 0, %s24
      %s25 = sphi 0, %s22
      %s26 = sphi 0, %s25
      %s42 = sphi 0, %s26
      %s48 = sphi 0, %s50
      %s51 = sphi 0, %s48
      %s52 = sphi 0, %s51
      %s68 = sphi 0, %s52
      %s74 = sphi 0, %s76
      %s77 = sphi 0, %s74
      %s78 = sphi 0, %s77
      %s94 = sphi 0, %s78
      %s100 = sphi 0, %s102
      %s103 = sphi 0, %s100
      %s104 = sphi 0, %s103
      %s120 = sphi 0, %s104
    $region4: #{tpu_custom_call.1} parent=1 // loop_header_branch
      %15 = sbr.rel (%p13) target = $region8
    $region5: #{tpu_custom_call.1} parent=1 // loop_body
      %s17 = ssub.s32 %s12, 1
      %s18 = ssub.s32 %s12, 2
      %s19 = sadd.s32 %s12, 1
      %s20 = ssub.s32 %s12, %s19
      %p21 = scmp.eq.s32.totalorder %s20, 0
      %s23 = sadd.s32 %s22, 1
      %s24 = scalar_select %p21, %s22, %s23
      %p27 = pneg %p21
      %p28 = scmp.eq.s32.totalorder %s12, 1
      %p29 = por %p27, %p28
      %p30 = scmp.ne.s32.totalorder %s22, %s25
      %p31 = scmp.eq.s32.totalorder %s12, 0
      %p32 = por %p30, %p31
      %p33 = scmp.ne.s32.totalorder %s22, %s25
      %p34 = scmp.eq.s32.totalorder %s17, 1
      %p35 = por %p33, %p34
      %p36 = scmp.ne.s32.totalorder %s25, %s26
      %p37 = scmp.eq.s32.totalorder %s17, 0
      %p38 = por %p36, %p37
      %p39 = scmp.ne.s32.totalorder %s25, %s26
      %p40 = scmp.eq.s32.totalorder %s18, 1
      %p41 = por %p39, %p40
      %p43 = scmp.ne.s32.totalorder %s26, %s42
      %p44 = scmp.eq.s32.totalorder %s18, 0
      %p45 = por %p43, %p44
      %s46 = ssub.s32 %s12, %s19
      %p47 = scmp.eq.s32.totalorder %s46, 0
      %s49 = sadd.s32 %s48, 1
      %s50 = scalar_select %p47, %s48, %s49
      %p53 = pneg %p47
      %p54 = scmp.eq.s32.totalorder %s12, 1
      %p55 = por %p53, %p54
      %p56 = scmp.ne.s32.totalorder %s48, %s51
      %p57 = scmp.eq.s32.totalorder %s12, 0
      %p58 = por %p56, %p57
      %p59 = scmp.ne.s32.totalorder %s48, %s51
      %p60 = scmp.eq.s32.totalorder %s17, 1
      %p61 = por %p59, %p60
      %p62 = scmp.ne.s32.totalorder %s51, %s52
      %p63 = scmp.eq.s32.totalorder %s17, 0
      %p64 = por %p62, %p63
      %p65 = scmp.ne.s32.totalorder %s51, %s52
      %p66 = scmp.eq.s32.totalorder %s18, 1
      %p67 = por %p65, %p66
      %p69 = scmp.ne.s32.totalorder %s52, %s68
      %p70 = scmp.eq.s32.totalorder %s18, 0
      %p71 = por %p69, %p70
      %s72 = ssub.s32 %s12, %s19
      %p73 = scmp.eq.s32.totalorder %s72, 0
      %s75 = sadd.s32 %s74, 1
      %s76 = scalar_select %p73, %s74, %s75
      %p79 = pneg %p73
      %p80 = scmp.eq.s32.totalorder %s12, 1
      %p81 = por %p79, %p80
      %p82 = scmp.ne.s32.totalorder %s74, %s77
      %p83 = scmp.eq.s32.totalorder %s12, 0
      %p84 = por %p82, %p83
      %p85 = scmp.ne.s32.totalorder %s74, %s77
      %p86 = scmp.eq.s32.totalorder %s17, 1
      %p87 = por %p85, %p86
      %p88 = scmp.ne.s32.totalorder %s77, %s78
      %p89 = scmp.eq.s32.totalorder %s17, 0
      %p90 = por %p88, %p89
      %p91 = scmp.ne.s32.totalorder %s77, %s78
      %p92 = scmp.eq.s32.totalorder %s18, 1
      %p93 = por %p91, %p92
      %p95 = scmp.ne.s32.totalorder %s78, %s94
      %p96 = scmp.eq.s32.totalorder %s18, 0
      %p97 = por %p95, %p96
      %s98 = ssub.s32 %s12, %s19
      %p99 = scmp.eq.s32.totalorder %s98, 0
      %s101 = sadd.s32 %s100, 1
      %s102 = scalar_select %p99, %s100, %s101
      %p105 = pneg %p99
      %p106 = scmp.eq.s32.totalorder %s12, 1
      %p107 = por %p105, %p106
      %p108 = scmp.ne.s32.totalorder %s100, %s103
      %p109 = scmp.eq.s32.totalorder %s12, 0
      %p110 = por %p108, %p109
      %p111 = scmp.ne.s32.totalorder %s100, %s103
      %p112 = scmp.eq.s32.totalorder %s17, 1
      %p113 = por %p111, %p112
      %p114 = scmp.ne.s32.totalorder %s103, %s104
      %p115 = scmp.eq.s32.totalorder %s17, 0
      %p116 = por %p114, %p115
      %p117 = scmp.ne.s32.totalorder %s103, %s104
      %p118 = scmp.eq.s32.totalorder %s18, 1
      %p119 = por %p117, %p118
      %p121 = scmp.ne.s32.totalorder %s104, %s120
      %p122 = scmp.eq.s32.totalorder %s18, 0
      %p123 = por %p121, %p122
      %p124 = scmp.le.s32.totalorder 1, %s12
      %p125 = scmp.lt.s32.totalorder %s12, 3
      %p126 = pnand %p124, %p125
      %p127 = pneg %p126
      // Predicated region
      $region9: #{tpu_custom_call.1} parent=5 // pred_check
        _
      $region10: #{tpu_custom_call.1} parent=5 // pred_check_branch
        %129 = sbr.rel (%p126) target = $region12
      $region11: #{tpu_custom_call.1} parent=5 // pred_region
        %s130 = ssub.s32 %s12, 1
      $region12: #{tpu_custom_call.1} parent=5 // pred_fallthru
        _
      %p131 = scmp.lt.s32.totalorder %s12, 2
      // Predicated region
      $region13: #{tpu_custom_call.1} parent=5 // pred_check
        %p132 = pneg %p131
      $region14: #{tpu_custom_call.1} parent=5 // pred_check_branch
        %134 = sbr.rel (%p132) target = $region16
      $region15: #{tpu_custom_call.1} parent=5 // pred_region
        // Predicated region
        $region17: #{tpu_custom_call.1} parent=15 // pred_check
          %p135 = pneg %p32
        $region18: #{tpu_custom_call.1} parent=15 // pred_check_branch
          %137 = sbr.rel (%p135) target = $region20
        $region19: #{tpu_custom_call.1} parent=15 // pred_region
          %p138 = scmp.lt.s32.totalorder %s12, 1
          %s139 = scalar_select %p138, %s12, 1
          %s140 = smul.addr %s139, 8
          %s141 = scalar_lea.vmem %s0, %s140
        $region20: #{tpu_custom_call.1} parent=15 // pred_fallthru
          _
        // Predicated region
        $region21: #{tpu_custom_call.1} parent=15 // pred_check
          %p142 = pneg %p58
        $region22: #{tpu_custom_call.1} parent=15 // pred_check_branch
          %144 = sbr.rel (%p142) target = $region24
        $region23: #{tpu_custom_call.1} parent=15 // pred_region
          %s145 = sand.u32 %s48, 1
          %s146 = scalar_lea.sflag [#allocation3], %s145
          %s147 = sand.u32 %s48, 1
          %s148 = smul.addr %s147, 8
          %s149 = scalar_lea.vmem [#allocation2], %s148
          %s151 = ssub.s32 128, 128
          %152 = vsyncadd %s146, %s151
          %s153 = smul.addr %s12, 128
          %s154 = scalar_lea.hbm %s1, %s153
          %s156 = sshll.u32 %s149, 4
          %s157 = int_to_ptr.vmem [resolvable:$true] %s156
          %159 = dma.hbm_to_vmem [thread:$0]  %s154, 128, %s157, %s146
        $region24: #{tpu_custom_call.1} parent=15 // pred_fallthru
          _
        // Predicated region
        $region25: #{tpu_custom_call.1} parent=15 // pred_check
          %p160 = pneg %p84
        $region26: #{tpu_custom_call.1} parent=15 // pred_check_branch
          %162 = sbr.rel (%p160) target = $region28
        $region27: #{tpu_custom_call.1} parent=15 // pred_region
          %p163 = scmp.lt.s32.totalorder %s12, 1
          %s164 = scalar_select %p163, %s12, 1
          %s165 = smul.addr %s164, 8
          %s166 = scalar_lea.vmem %s2, %s165
        $region28: #{tpu_custom_call.1} parent=15 // pred_fallthru
          _
      $region16: #{tpu_custom_call.1} parent=5 // pred_fallthru
        _
      %p167 = scmp.le.s32.totalorder 1, %s12
      %p168 = scmp.lt.s32.totalorder %s12, 3
      %p169 = pnand %p167, %p168
      %p170 = pneg %p169
      // Predicated region
      $region29: #{tpu_custom_call.1} parent=5 // pred_check
        _
      $region30: #{tpu_custom_call.1} parent=5 // pred_check_branch
        %172 = sbr.rel (%p169) target = $region32
      $region31: #{tpu_custom_call.1} parent=5 // pred_region
        %s173 = ssub.s32 %s12, 1
        %s174 = sand.u32 %s51, 1
        %s175 = scalar_lea.sflag [#allocation3], %s174
        %s176 = sand.u32 %s51, 1
        %s177 = smul.addr %s176, 8
        %s178 = scalar_lea.vmem [#allocation2], %s177
        // Predicated region
        $region33: #{tpu_custom_call.1} parent=31 // pred_check
          %p179 = pneg %p64
        $region34: #{tpu_custom_call.1} parent=31 // pred_check_branch
          %181 = sbr.rel (%p179) target = $region36
        $region35: #{tpu_custom_call.1} parent=31 // pred_region
          %182 = dma.done %s175, 128
        $region36: #{tpu_custom_call.1} parent=31 // pred_fallthru
          _
        %p183 = scmp.lt.s32.totalorder %s17, 1
        %s184 = scalar_select %p183, %s17, 1
        %s185 = smul.addr %s184, 8
        %s186 = scalar_lea.vmem %s0, %s185
        %p187 = pneg %p38
        %p188 = pneg %p35
        %s189 = sand.u32 %s51, 1
        %s190 = scalar_lea.sflag [#allocation3], %s189
        %s191 = sand.u32 %s51, 1
        %s192 = smul.addr %s191, 8
        %s193 = scalar_lea.vmem [#allocation2], %s192
        %p194 = pneg %p64
        %p195 = pneg %p61
        %p196 = scmp.lt.s32.totalorder %s17, 1
        %s197 = scalar_select %p196, %s17, 1
        %s198 = smul.addr %s197, 8
        %s199 = scalar_lea.vmem %s2, %s198
        %p200 = pneg %p90
        %p201 = pneg %p87
        %p202 = pneg %p116
        %p203 = pneg %p113
        %p204 = scmp.lt.s32.totalorder %s17, 1
        %s205 = scalar_select %p204, %s17, 1
        %s206 = smul.addr %s205, 8
        %s207 = scalar_lea.vmem %s3, %s206
        %p208 = scmp.lt.s32.totalorder %s17, 1
        %s209 = scalar_select %p208, %s17, 1
        %s210 = smul.addr %s209, 8
        %s211 = scalar_lea.vmem %s0, %s210
        %p212 = scmp.lt.s32.totalorder %s17, 1
        %s213 = scalar_select %p212, %s17, 1
        %s214 = smul.addr %s213, 8
        %s215 = scalar_lea.vmem %s2, %s214
        %p216 = scmp.lt.s32.totalorder %s17, 1
        %s217 = scalar_select %p216, %s17, 1
        %s218 = smul.addr %s217, 8
        %s219 = scalar_lea.vmem %s3, %s218
        %v220 = vld [vmem:[%s211] sm:$0xff]
        %v221 = vld [vmem:[%s178] sm:$0xff]
        %v222 = vld [vmem:[%s215] sm:$0xff]
        %v223 = vlaneseq
        %v224 = vand.u32 %v223, 127
        %225 = vset.pattern.permute.xlu0 0
        %226 = vperm.xlu0 %225, %v222
        %v227 = vpop.permute.xlu0 %226
        %vm228 = vcmp.eq.s32.totalorder %v224, %v227
        %229 = vmax.xlane.f32.xlu0 %v220
        %v230 = vpop.xlane.xlu0 %229
        %v231 = vsub.f32 %v220, %v230
        %v232 = vmul.f32 %v231, 1.442695
        %v233 = vpow.pop %v232
        %234 = vadd.xlane.f32.xlu0 %v233
        %v235 = vpop.xlane.xlu0 %234
        %v236 = vlog2.pop %v235
        %v237 = vmul.f32 %v236, 0.6931472
        %v238 = vadd.f32 %v230, %v237
        %v239 = vsel %vm228, %v220, 0.0
        %240 = vadd.xlane.f32.xlu0 %v239
        %v241 = vpop.xlane.xlu0 %240
        %v242 = vsub.f32 %v238, %v241
        %v243 = vsel %vm228, %v221, 0.0
        %244 = vadd.xlane.f32.xlu0 %v243
        %v245 = vpop.xlane.xlu0 %244
        %v246 = vlog2.pop %v245
        %v247 = vmul.f32 %v246, 0.6931472
        %v248 = vsub.f32 0.0, %v247
        %249 = vadd.xlane.f32.xlu0 %v221
        %v250 = vpop.xlane.xlu0 %249
        %v251 = vmul.f32 %v221, %v220
        %252 = vadd.xlane.f32.xlu0 %v251
        %v253 = vpop.xlane.xlu0 %252
        %v254 = vmul.f32 %v238, %v250
        %v255 = vsub.f32 %v254, %v253
        %v256 = vrcp.pop %v248
        %v257 = vmul.f32 %v242, %v256
        %vm258 = vcmp.lt.f32.partialorder %v257, 0.0
        %v259 = vsel %vm258, 0.0, %v257
        %v260 = vsub.f32 0.0, %v259
        %v261 = vmul.f32 %v260, 1.442695
        %v262 = vpow.pop %v261
        %v263 = vsub.f32 1.0, %v262
        %v264 = vmul.f32 %v255, %v263
        %vm265 = vcmask 7168
        %266 = vst.msk [vmem:[%s219] sm:$0xff] %vm265, %v264
        %p267 = scmp.lt.s32.totalorder %s17, 1
        %s268 = scalar_select %p267, %s17, 1
        %s269 = smul.addr %s268, 8
        %s270 = scalar_lea.vmem %s3, %s269
        // Predicated region
        $region37: #{tpu_custom_call.1} parent=31 // pred_check
          %p271 = pneg %p113
        $region38: #{tpu_custom_call.1} parent=31 // pred_check_branch
          %273 = sbr.rel (%p271) target = $region40
        $region39: #{tpu_custom_call.1} parent=31 // pred_region
          _
        $region40: #{tpu_custom_call.1} parent=31 // pred_fallthru
          _
      $region32: #{tpu_custom_call.1} parent=5 // pred_fallthru
        _
      %p274 = scmp.le.s32.totalorder 2, %s12
      // Predicated region
      $region41: #{tpu_custom_call.1} parent=5 // pred_check
        %p275 = pneg %p274
      $region42: #{tpu_custom_call.1} parent=5 // pred_check_branch
        %277 = sbr.rel (%p275) target = $region44
      $region43: #{tpu_custom_call.1} parent=5 // pred_region
        %s278 = ssub.s32 %s12, 2
        // Predicated region
        $region45: #{tpu_custom_call.1} parent=43 // pred_check
          %p279 = pneg %p119
        $region46: #{tpu_custom_call.1} parent=43 // pred_check_branch
          %281 = sbr.rel (%p279) target = $region48
        $region47: #{tpu_custom_call.1} parent=43 // pred_region
          %p282 = scmp.lt.s32.totalorder %s18, 1
          %s283 = scalar_select %p282, %s18, 1
          %s284 = smul.addr %s283, 8
          %s285 = scalar_lea.vmem %s3, %s284
        $region48: #{tpu_custom_call.1} parent=43 // pred_fallthru
          _
      $region44: #{tpu_custom_call.1} parent=5 // pred_fallthru
        _
    $region6: #{tpu_custom_call.1} parent=1 // loop_footer
      %s16 = sadd.s32 1, %s12
    $region7: #{tpu_custom_call.1} parent=1 // loop_footer_branch
      %11 = sbr.rel target = $region3
    $region8: #{tpu_custom_call.1} parent=1 // loop_exit
      _
    %286 = vsyncpa [#allocation3], 1
    %s287 = scalar_lea.sflag [#allocation3], 1
    %288 = vsyncpa %s287, 1

</llo_original>
